<compile_context>
chip_gen: v7x
topology: tpu7x:2x2x1
jax: 0.10.0
libtpu: 0.0.40
codegen_flags: <defaults>
</compile_context>

<pallas_src>
import jax
import jax.numpy as jnp
from jax.experimental import pallas as pl
from jax.experimental.pallas import tpu as pltpu

EPS = 1e-5
NEG_SLOPE = 0.01


def _leaky_relu(h):
    return jnp.where(h >= 0, h, NEG_SLOPE * h)


def _im2col_k3(h):
    """h: (L, C) f32 -> (L, 3*C) bf16 im2col operand for a 3-tap, padding=1 conv.

    Row l is [h[l-1] | h[l] | h[l+1]] with zeros at the sequence edges. Built from one
    zero-padded buffer + one lane-axis concat (no full-size shifted copies), then cast to
    bf16 so the single fused matmul runs at native MXU throughput with K = 3*C.
    """
    L, C = h.shape
    zrow = jnp.zeros((1, C), h.dtype)
    hp = jnp.concatenate([zrow, h, zrow], axis=0)                    # (L+2, C)
    im2col = jnp.concatenate([hp[:L], hp[1:L + 1], hp[2:L + 2]], axis=1)  # (L, 3C)
    return im2col.astype(jnp.bfloat16)


def _partial_stats(h):
    """h: (L, C) f32 -> (2, C) [sum, sum of squares] for single-pass batch-norm stats."""
    return jnp.concatenate(
        [jnp.sum(h, axis=0, keepdims=True),
         jnp.sum(h * h, axis=0, keepdims=True)], axis=0)


# --------------------------- stage 1: conv1 + stats ---------------------------
def _conv1_kernel(x_ref, w_ref, h_ref, s_ref):
    # x_ref: (1, L, Cin) f32   w_ref: (3*Cin, Cout) bf16
    # h_ref: (1, L, Cout) f32  s_ref: (1, 2, Cout) f32
    x = x_ref[0]
    h = jnp.dot(_im2col_k3(x), w_ref[...], preferred_element_type=jnp.float32)
    h_ref[0] = h
    s_ref[0] = _partial_stats(h)


# ------------------- stage 2: BN1 affine + LeakyReLU + conv2 + stats -------------------
def _bn1_conv2_kernel(h1_ref, sc_ref, sh_ref, w_ref, h2_ref, s_ref):
    # h1_ref: (1, L, C) f32; sc/sh: (1, C) f32 folded BN1 scale/shift; w_ref: (3C, C) bf16
    a = _leaky_relu(h1_ref[0] * sc_ref[...] + sh_ref[...])
    h2 = jnp.dot(_im2col_k3(a), w_ref[...], preferred_element_type=jnp.float32)
    h2_ref[0] = h2
    s_ref[0] = _partial_stats(h2)


# ---------------- stage 3: BN2 affine + residual + LeakyReLU (lane-dense) ----------------
def _bn2_residual_kernel(h2_ref, x_ref, sc_ref, sh_ref, o_ref):
    # All refs lane-dense: (1, R, D) with D a multiple of 128 lanes when possible.
    h = h2_ref[0] * sc_ref[...] + sh_ref[...] + x_ref[0]
    o_ref[0] = _leaky_relu(h)


def _bn_scale_shift(partials, gamma, beta, count):
    """partials: (tiles, 2, C) per-tile [sum, sumsq] -> folded training-mode BN affine."""
    total = jnp.sum(partials, axis=0)                       # (2, C)
    mean = total[0] / count
    var = jnp.maximum(total[1] / count - mean * mean, 0.0)  # biased variance, single pass
    scale = gamma * jax.lax.rsqrt(var + EPS)
    shift = beta - mean * scale
    return (scale.reshape(1, -1).astype(jnp.float32),
            shift.reshape(1, -1).astype(jnp.float32))


@jax.jit
def basic_block(x_ncl, w1, gamma1, beta1, w2, gamma2, beta2):
    """x_ncl: (N, C, L) like PyTorch. w*: (C_out, C_in, 3) like nn.Conv1d.weight."""
    N, C, L = x_ncl.shape
    x_nlc = jnp.transpose(x_ncl, (0, 2, 1)).astype(jnp.float32)      # NCL -> NLC

    # Tap-fused conv weights: (Cout, Cin, 3) -> (3*Cin, Cout), bf16 for the MXU.
    w1_f = jnp.transpose(w1, (2, 1, 0)).reshape(3 * C, C).astype(jnp.bfloat16)
    w2_f = jnp.transpose(w2, (2, 1, 0)).reshape(3 * C, C).astype(jnp.bfloat16)

    cparams = pltpu.CompilerParams(
        dimension_semantics=("parallel",),          # independent per batch element
        vmem_limit_bytes=32 * 1024 * 1024)

    tile3d = lambda b: (b, 0, 0)   # per-batch-element tile
    full2d = lambda b: (0, 0)      # weights / scale / shift stay resident

    # ---- stage 1: conv1 + per-tile BN1 partial stats -------------------------------
    h1, s1 = pl.pallas_call(
        _conv1_kernel,
        grid=(N,),
        in_specs=[pl.BlockSpec((1, L, C), tile3d),
                  pl.BlockSpec((3 * C, C), full2d)],
        out_specs=(pl.BlockSpec((1, L, C), tile3d),
                   pl.BlockSpec((1, 2, C), tile3d)),
        out_shape=(jax.ShapeDtypeStruct((N, L, C), jnp.float32),
                   jax.ShapeDtypeStruct((N, 2, C), jnp.float32)),
        compiler_params=cparams,
    )(x_nlc, w1_f)
    sc1, sh1 = _bn_scale_shift(s1, gamma1, beta1, N * L)

    # ---- stage 2: BN1 + LeakyReLU + conv2 + per-tile BN2 partial stats --------------
    h2, s2 = pl.pallas_call(
        _bn1_conv2_kernel,
        grid=(N,),
        in_specs=[pl.BlockSpec((1, L, C), tile3d),
                  pl.BlockSpec((1, C), full2d),
                  pl.BlockSpec((1, C), full2d),
                  pl.BlockSpec((3 * C, C), full2d)],
        out_specs=(pl.BlockSpec((1, L, C), tile3d),
                   pl.BlockSpec((1, 2, C), tile3d)),
        out_shape=(jax.ShapeDtypeStruct((N, L, C), jnp.float32),
                   jax.ShapeDtypeStruct((N, 2, C), jnp.float32)),
        compiler_params=cparams,
    )(h1, sc1, sh1, w2_f)
    sc2, sh2 = _bn_scale_shift(s2, gamma2, beta2, N * L)

    # ---- stage 3: BN2 + residual + LeakyReLU on a lane-dense layout ------------------
    # Fold (L, C) -> (R, D) with D = 128 lanes when shapes allow, so the elementwise pass
    # and the output store are unmasked (lane-dense out_spec); otherwise fall back to D=C.
    if C <= 128 and 128 % C == 0 and (L * C) % 128 == 0:
        D = 128
    else:
        D = C
    rep = D // C
    R = (L * C) // D

    out_d = pl.pallas_call(
        _bn2_residual_kernel,
        grid=(N,),
        in_specs=[pl.BlockSpec((1, R, D), tile3d),
                  pl.BlockSpec((1, R, D), tile3d),
                  pl.BlockSpec((1, D), full2d),
                  pl.BlockSpec((1, D), full2d)],
        out_specs=pl.BlockSpec((1, R, D), tile3d),
        out_shape=jax.ShapeDtypeStruct((N, R, D), jnp.float32),
        compiler_params=cparams,
    )(h2.reshape(N, R, D), x_nlc.reshape(N, R, D),
      jnp.tile(sc2, (1, rep)), jnp.tile(sh2, (1, rep)))

    out_nlc = out_d.reshape(N, L, C)
    return jnp.transpose(out_nlc, (0, 2, 1))                          # NLC -> NCL


def basic_block_ref(x_ncl, w1, gamma1, beta1, w2, gamma2, beta2):
    """Pure-JAX f32 reference mirroring the PyTorch forward (NCL layout)."""
    def conv(x, w):
        return jax.lax.conv_general_dilated(
            x, w, window_strides=(1,), padding=[(1, 1)],
            dimension_numbers=("NCH", "OIH", "NCH"))

    def bn(h, gamma, beta):
        mean = jnp.mean(h, axis=(0, 2), keepdims=True)
        var = jnp.mean((h - mean) ** 2, axis=(0, 2), keepdims=True)
        return ((h - mean) * jax.lax.rsqrt(var + EPS)
                * gamma.reshape(1, -1, 1) + beta.reshape(1, -1, 1))

    h = _leaky_relu(bn(conv(x_ncl, w1), gamma1, beta1))
    h = bn(conv(h, w2), gamma2, beta2)
    return _leaky_relu(h + x_ncl)


if __name__ == "__main__":
    N, C, L = 2, 32, 16   # batch, channels (in == out), sequence length

    key = jax.random.PRNGKey(0)
    kx, kw1, kw2, kg1, kb1, kg2, kb2 = jax.random.split(key, 7)

    x = jax.random.normal(kx, (N, C, L), dtype=jnp.float32)           # PyTorch NCL
    w1 = 0.1 * jax.random.normal(kw1, (C, C, 3), dtype=jnp.float32)   # Conv1d weight (Cout,Cin,K)
    w2 = 0.1 * jax.random.normal(kw2, (C, C, 3), dtype=jnp.float32)
    gamma1 = 1.0 + 0.1 * jax.random.normal(kg1, (C,), dtype=jnp.float32)
    beta1 = 0.1 * jax.random.normal(kb1, (C,), dtype=jnp.float32)
    gamma2 = 1.0 + 0.1 * jax.random.normal(kg2, (C,), dtype=jnp.float32)
    beta2 = 0.1 * jax.random.normal(kb2, (C,), dtype=jnp.float32)

    out = jax.block_until_ready(basic_block(x, w1, gamma1, beta1, w2, gamma2, beta2))
    ref = jax.block_until_ready(basic_block_ref(x, w1, gamma1, beta1, w2, gamma2, beta2))

    assert out.shape == (N, C, L), out.shape
    max_err = float(jnp.max(jnp.abs(out - ref)))
    # Kernel uses bf16 MXU operands (f32 accumulation); reference is all-f32.
    assert jnp.allclose(out, ref, rtol=2e-2, atol=2e-2), max_err
    print("KERNEL_OK")
</pallas_src>

<mosaic_0001>
module attributes {stable_mosaic.version = 11 : i64} {
  func.func @_conv1_kernel(%arg0: i32, %arg1: memref<1x16x32xf32, #tpu.memory_space<vmem>>, %arg2: memref<96x32xbf16, #tpu.memory_space<vmem>>, %arg3: memref<1x16x32xf32, #tpu.memory_space<vmem>>, %arg4: memref<1x2x32xf32, #tpu.memory_space<vmem>>) attributes {dimension_semantics = [#tpu.dimension_semantics<parallel>], iteration_bounds = array<i64: 2>, scalar_prefetch = 0 : i64, scratch_operands = 0 : i64, tpu.core_type = #tpu.core_type<tc>, window_params = [{transform_indices = @transform_0, window_bounds = array<i64: 1, 16, 32>}, {pipeline_mode = #tpu.pipeline_mode<synchronous>, transform_indices = @transform_1, window_bounds = array<i64: 96, 32>}, {transform_indices = @transform_2, window_bounds = array<i64: 1, 16, 32>}, {transform_indices = @transform_3, window_bounds = array<i64: 1, 2, 32>}]} {
    %c0 = arith.constant 0 : index
    %c0_0 = arith.constant 0 : index
    %c0_1 = arith.constant 0 : index
    %0 = vector.load %arg1[%c0, %c0_0, %c0_1] : memref<1x16x32xf32, #tpu.memory_space<vmem>>, vector<1x16x32xf32>
    %1 = vector.shape_cast %0 : vector<1x16x32xf32> to vector<16x32xf32>
    %cst = arith.constant 0.000000e+00 : f32
    %2 = vector.broadcast %cst : f32 to vector<1x32xf32>
    %3 = tpu.concatenate %2, %1, %2 in 0 : vector<1x32xf32>, vector<16x32xf32>, vector<1x32xf32> -> vector<18x32xf32>
    %4 = vector.extract_strided_slice %3 {offsets = [0, 0], sizes = [16, 32], strides = [1, 1]} : vector<18x32xf32> to vector<16x32xf32>
    %5 = vector.extract_strided_slice %3 {offsets = [1, 0], sizes = [16, 32], strides = [1, 1]} : vector<18x32xf32> to vector<16x32xf32>
    %6 = vector.extract_strided_slice %3 {offsets = [2, 0], sizes = [16, 32], strides = [1, 1]} : vector<18x32xf32> to vector<16x32xf32>
    %7 = tpu.concatenate %4, %5, %6 in 1 : vector<16x32xf32>, vector<16x32xf32>, vector<16x32xf32> -> vector<16x96xf32>
    %8 = arith.truncf %7 : vector<16x96xf32> to vector<16x96xbf16>
    %c0_2 = arith.constant 0 : index
    %c0_3 = arith.constant 0 : index
    %9 = vector.load %arg2[%c0_2, %c0_3] : memref<96x32xbf16, #tpu.memory_space<vmem>>, vector<96x32xbf16>
    %cst_4 = arith.constant dense<0.000000e+00> : vector<16x32xf32>
    %10 = tpu.matmul %8, %9, %cst_4 {dimension_numbers = #tpu.dot_dimension_numbers<[1], [0], [0], [1], [0, 0, 1, 1], [], []>} : vector<16x96xbf16>, vector<96x32xbf16>, vector<16x32xf32> -> vector<16x32xf32>
    %c0_5 = arith.constant 0 : index
    %c0_6 = arith.constant 0 : index
    %c0_7 = arith.constant 0 : index
    %11 = vector.load %arg3[%c0_5, %c0_6, %c0_7] : memref<1x16x32xf32, #tpu.memory_space<vmem>>, vector<1x16x32xf32>
    %12 = vector.shape_cast %11 : vector<1x16x32xf32> to vector<16x32xf32>
    %13 = vector.shape_cast %10 : vector<16x32xf32> to vector<1x16x32xf32>
    tpu.vector_store %arg3[%c0_5, %c0_6, %c0_7], %13 {strides = array<i32>} : memref<1x16x32xf32, #tpu.memory_space<vmem>>, vector<1x16x32xf32>,
    %cst_8 = arith.constant dense<0.000000e+00> : vector<32xf32>
    %14 = vector.multi_reduction <add>, %10, %cst_8 [0] : vector<16x32xf32> to vector<32xf32>
    %15 = vector.shape_cast %14 : vector<32xf32> to vector<1x32xf32>
    %16 = arith.mulf %10, %10 : vector<16x32xf32>
    %cst_9 = arith.constant dense<0.000000e+00> : vector<32xf32>
    %17 = vector.multi_reduction <add>, %16, %cst_9 [0] : vector<16x32xf32> to vector<32xf32>
    %18 = vector.shape_cast %17 : vector<32xf32> to vector<1x32xf32>
    %19 = tpu.concatenate %15, %18 in 0 : vector<1x32xf32>, vector<1x32xf32> -> vector<2x32xf32>
    %c0_10 = arith.constant 0 : index
    %c0_11 = arith.constant 0 : index
    %c0_12 = arith.constant 0 : index
    %20 = vector.load %arg4[%c0_10, %c0_11, %c0_12] : memref<1x2x32xf32, #tpu.memory_space<vmem>>, vector<1x2x32xf32>
    %21 = vector.shape_cast %20 : vector<1x2x32xf32> to vector<2x32xf32>
    %22 = vector.shape_cast %19 : vector<2x32xf32> to vector<1x2x32xf32>
    tpu.vector_store %arg4[%c0_10, %c0_11, %c0_12], %22 {strides = array<i32>} : memref<1x2x32xf32, #tpu.memory_space<vmem>>, vector<1x2x32xf32>,
    return
  }
  func.func @transform_0(%arg0: i32) -> (i32, i32, i32) {
    %c0_i32 = arith.constant 0 : i32
    %c0_i32_0 = arith.constant 0 : i32
    %c0_i32_1 = arith.constant 0 : i32
    return %arg0, %c0_i32, %c0_i32_0 : i32, i32, i32
  }
  func.func @transform_1(%arg0: i32) -> (i32, i32) {
    %c0_i32 = arith.constant 0 : i32
    %c0_i32_0 = arith.constant 0 : i32
    %c0_i32_1 = arith.constant 0 : i32
    return %c0_i32, %c0_i32_0 : i32, i32
  }
  func.func @transform_2(%arg0: i32) -> (i32, i32, i32) {
    %c0_i32 = arith.constant 0 : i32
    %c0_i32_0 = arith.constant 0 : i32
    %c0_i32_1 = arith.constant 0 : i32
    return %arg0, %c0_i32, %c0_i32_0 : i32, i32, i32
  }
  func.func @transform_3(%arg0: i32) -> (i32, i32, i32) {
    %c0_i32 = arith.constant 0 : i32
    %c0_i32_0 = arith.constant 0 : i32
    %c0_i32_1 = arith.constant 0 : i32
    return %arg0, %c0_i32, %c0_i32_0 : i32, i32, i32
  }
}

module attributes {stable_mosaic.version = 11 : i64} {
  func.func @_bn1_conv2_kernel(%arg0: i32, %arg1: memref<1x16x32xf32, #tpu.memory_space<vmem>>, %arg2: memref<1x32xf32, #tpu.memory_space<vmem>>, %arg3: memref<1x32xf32, #tpu.memory_space<vmem>>, %arg4: memref<96x32xbf16, #tpu.memory_space<vmem>>, %arg5: memref<1x16x32xf32, #tpu.memory_space<vmem>>, %arg6: memref<1x2x32xf32, #tpu.memory_space<vmem>>) attributes {dimension_semantics = [#tpu.dimension_semantics<parallel>], iteration_bounds = array<i64: 2>, scalar_prefetch = 0 : i64, scratch_operands = 0 : i64, tpu.core_type = #tpu.core_type<tc>, window_params = [{transform_indices = @transform_0, window_bounds = array<i64: 1, 16, 32>}, {pipeline_mode = #tpu.pipeline_mode<synchronous>, transform_indices = @transform_1, window_bounds = array<i64: 1, 32>}, {pipeline_mode = #tpu.pipeline_mode<synchronous>, transform_indices = @transform_2, window_bounds = array<i64: 1, 32>}, {pipeline_mode = #tpu.pipeline_mode<synchronous>, transform_indices = @transform_3, window_bounds = array<i64: 96, 32>}, {transform_indices = @transform_4, window_bounds = array<i64: 1, 16, 32>}, {transform_indices = @transform_5, window_bounds = array<i64: 1, 2, 32>}]} {
    %c0 = arith.constant 0 : index
    %c0_0 = arith.constant 0 : index
    %c0_1 = arith.constant 0 : index
    %0 = vector.load %arg1[%c0, %c0_0, %c0_1] : memref<1x16x32xf32, #tpu.memory_space<vmem>>, vector<1x16x32xf32>
    %1 = vector.shape_cast %0 : vector<1x16x32xf32> to vector<16x32xf32>
    %c0_2 = arith.constant 0 : index
    %c0_3 = arith.constant 0 : index
    %2 = vector.load %arg2[%c0_2, %c0_3] : memref<1x32xf32, #tpu.memory_space<vmem>>, vector<1x32xf32>
    %3 = vector.broadcast %2 : vector<1x32xf32> to vector<16x32xf32>
    %4 = arith.mulf %1, %3 : vector<16x32xf32>
    %c0_4 = arith.constant 0 : index
    %c0_5 = arith.constant 0 : index
    %5 = vector.load %arg3[%c0_4, %c0_5] : memref<1x32xf32, #tpu.memory_space<vmem>>, vector<1x32xf32>
    %6 = vector.broadcast %5 : vector<1x32xf32> to vector<16x32xf32>
    %7 = arith.addf %4, %6 : vector<16x32xf32>
    %cst = arith.constant 0.000000e+00 : f32
    %8 = vector.broadcast %cst : f32 to vector<16x32xf32>
    %9 = arith.cmpf oge, %7, %8 : vector<16x32xf32>
    %cst_6 = arith.constant 0.00999999977 : f32
    %10 = vector.broadcast %cst_6 : f32 to vector<16x32xf32>
    %11 = arith.mulf %10, %7 : vector<16x32xf32>
    %12 = arith.select %9, %7, %11 : vector<16x32xi1>, vector<16x32xf32>
    %cst_7 = arith.constant 0.000000e+00 : f32
    %13 = vector.broadcast %cst_7 : f32 to vector<1x32xf32>
    %14 = tpu.concatenate %13, %12, %13 in 0 : vector<1x32xf32>, vector<16x32xf32>, vector<1x32xf32> -> vector<18x32xf32>
    %15 = vector.extract_strided_slice %14 {offsets = [0, 0], sizes = [16, 32], strides = [1, 1]} : vector<18x32xf32> to vector<16x32xf32>
    %16 = vector.extract_strided_slice %14 {offsets = [1, 0], sizes = [16, 32], strides = [1, 1]} : vector<18x32xf32> to vector<16x32xf32>
    %17 = vector.extract_strided_slice %14 {offsets = [2, 0], sizes = [16, 32], strides = [1, 1]} : vector<18x32xf32> to vector<16x32xf32>
    %18 = tpu.concatenate %15, %16, %17 in 1 : vector<16x32xf32>, vector<16x32xf32>, vector<16x32xf32> -> vector<16x96xf32>
    %19 = arith.truncf %18 : vector<16x96xf32> to vector<16x96xbf16>
    %c0_8 = arith.constant 0 : index
    %c0_9 = arith.constant 0 : index
    %20 = vector.load %arg4[%c0_8, %c0_9] : memref<96x32xbf16, #tpu.memory_space<vmem>>, vector<96x32xbf16>
    %cst_10 = arith.constant dense<0.000000e+00> : vector<16x32xf32>
    %21 = tpu.matmul %19, %20, %cst_10 {dimension_numbers = #tpu.dot_dimension_numbers<[1], [0], [0], [1], [0, 0, 1, 1], [], []>} : vector<16x96xbf16>, vector<96x32xbf16>, vector<16x32xf32> -> vector<16x32xf32>
    %c0_11 = arith.constant 0 : index
    %c0_12 = arith.constant 0 : index
    %c0_13 = arith.constant 0 : index
    %22 = vector.load %arg5[%c0_11, %c0_12, %c0_13] : memref<1x16x32xf32, #tpu.memory_space<vmem>>, vector<1x16x32xf32>
    %23 = vector.shape_cast %22 : vector<1x16x32xf32> to vector<16x32xf32>
    %24 = vector.shape_cast %21 : vector<16x32xf32> to vector<1x16x32xf32>
    tpu.vector_store %arg5[%c0_11, %c0_12, %c0_13], %24 {strides = array<i32>} : memref<1x16x32xf32, #tpu.memory_space<vmem>>, vector<1x16x32xf32>,
    %cst_14 = arith.constant dense<0.000000e+00> : vector<32xf32>
    %25 = vector.multi_reduction <add>, %21, %cst_14 [0] : vector<16x32xf32> to vector<32xf32>
    %26 = vector.shape_cast %25 : vector<32xf32> to vector<1x32xf32>
    %27 = arith.mulf %21, %21 : vector<16x32xf32>
    %cst_15 = arith.constant dense<0.000000e+00> : vector<32xf32>
    %28 = vector.multi_reduction <add>, %27, %cst_15 [0] : vector<16x32xf32> to vector<32xf32>
    %29 = vector.shape_cast %28 : vector<32xf32> to vector<1x32xf32>
    %30 = tpu.concatenate %26, %29 in 0 : vector<1x32xf32>, vector<1x32xf32> -> vector<2x32xf32>
    %c0_16 = arith.constant 0 : index
    %c0_17 = arith.constant 0 : index
    %c0_18 = arith.constant 0 : index
    %31 = vector.load %arg6[%c0_16, %c0_17, %c0_18] : memref<1x2x32xf32, #tpu.memory_space<vmem>>, vector<1x2x32xf32>
    %32 = vector.shape_cast %31 : vector<1x2x32xf32> to vector<2x32xf32>
    %33 = vector.shape_cast %30 : vector<2x32xf32> to vector<1x2x32xf32>
    tpu.vector_store %arg6[%c0_16, %c0_17, %c0_18], %33 {strides = array<i32>} : memref<1x2x32xf32, #tpu.memory_space<vmem>>, vector<1x2x32xf32>,
    return
  }
  func.func @transform_0(%arg0: i32) -> (i32, i32, i32) {
    %c0_i32 = arith.constant 0 : i32
    %c0_i32_0 = arith.constant 0 : i32
    %c0_i32_1 = arith.constant 0 : i32
    return %arg0, %c0_i32, %c0_i32_0 : i32, i32, i32
  }
  func.func @transform_1(%arg0: i32) -> (i32, i32) {
    %c0_i32 = arith.constant 0 : i32
    %c0_i32_0 = arith.constant 0 : i32
    %c0_i32_1 = arith.constant 0 : i32
    return %c0_i32, %c0_i32_0 : i32, i32
  }
  func.func @transform_2(%arg0: i32) -> (i32, i32) {
    %c0_i32 = arith.constant 0 : i32
    %c0_i32_0 = arith.constant 0 : i32
    %c0_i32_1 = arith.constant 0 : i32
    return %c0_i32, %c0_i32_0 : i32, i32
  }
  func.func @transform_3(%arg0: i32) -> (i32, i32) {
    %c0_i32 = arith.constant 0 : i32
    %c0_i32_0 = arith.constant 0 : i32
    %c0_i32_1 = arith.constant 0 : i32
    return %c0_i32, %c0_i32_0 : i32, i32
  }
  func.func @transform_4(%arg0: i32) -> (i32, i32, i32) {
    %c0_i32 = arith.constant 0 : i32
    %c0_i32_0 = arith.constant 0 : i32
    %c0_i32_1 = arith.constant 0 : i32
    return %arg0, %c0_i32, %c0_i32_0 : i32, i32, i32
  }
  func.func @transform_5(%arg0: i32) -> (i32, i32, i32) {
    %c0_i32 = arith.constant 0 : i32
    %c0_i32_0 = arith.constant 0 : i32
    %c0_i32_1 = arith.constant 0 : i32
    return %arg0, %c0_i32, %c0_i32_0 : i32, i32, i32
  }
}

module attributes {stable_mosaic.version = 11 : i64} {
  func.func @_bn2_residual_kernel(%arg0: i32, %arg1: memref<1x4x128xf32, #tpu.memory_space<vmem>>, %arg2: memref<1x4x128xf32, #tpu.memory_space<vmem>>, %arg3: memref<1x128xf32, #tpu.memory_space<vmem>>, %arg4: memref<1x128xf32, #tpu.memory_space<vmem>>, %arg5: memref<1x4x128xf32, #tpu.memory_space<vmem>>) attributes {dimension_semantics = [#tpu.dimension_semantics<parallel>], iteration_bounds = array<i64: 2>, scalar_prefetch = 0 : i64, scratch_operands = 0 : i64, tpu.core_type = #tpu.core_type<tc>, window_params = [{transform_indices = @transform_0, window_bounds = array<i64: 1, 4, 128>}, {transform_indices = @transform_1, window_bounds = array<i64: 1, 4, 128>}, {pipeline_mode = #tpu.pipeline_mode<synchronous>, transform_indices = @transform_2, window_bounds = array<i64: 1, 128>}, {pipeline_mode = #tpu.pipeline_mode<synchronous>, transform_indices = @transform_3, window_bounds = array<i64: 1, 128>}, {transform_indices = @transform_4, window_bounds = array<i64: 1, 4, 128>}]} {
    %c0 = arith.constant 0 : index
    %c0_0 = arith.constant 0 : index
    %c0_1 = arith.constant 0 : index
    %0 = vector.load %arg1[%c0, %c0_0, %c0_1] : memref<1x4x128xf32, #tpu.memory_space<vmem>>, vector<1x4x128xf32>
    %1 = vector.shape_cast %0 : vector<1x4x128xf32> to vector<4x128xf32>
    %c0_2 = arith.constant 0 : index
    %c0_3 = arith.constant 0 : index
    %2 = vector.load %arg3[%c0_2, %c0_3] : memref<1x128xf32, #tpu.memory_space<vmem>>, vector<1x128xf32>
    %3 = vector.broadcast %2 : vector<1x128xf32> to vector<4x128xf32>
    %4 = arith.mulf %1, %3 : vector<4x128xf32>
    %c0_4 = arith.constant 0 : index
    %c0_5 = arith.constant 0 : index
    %5 = vector.load %arg4[%c0_4, %c0_5] : memref<1x128xf32, #tpu.memory_space<vmem>>, vector<1x128xf32>
    %6 = vector.broadcast %5 : vector<1x128xf32> to vector<4x128xf32>
    %7 = arith.addf %4, %6 : vector<4x128xf32>
    %c0_6 = arith.constant 0 : index
    %c0_7 = arith.constant 0 : index
    %c0_8 = arith.constant 0 : index
    %8 = vector.load %arg2[%c0_6, %c0_7, %c0_8] : memref<1x4x128xf32, #tpu.memory_space<vmem>>, vector<1x4x128xf32>
    %9 = vector.shape_cast %8 : vector<1x4x128xf32> to vector<4x128xf32>
    %10 = arith.addf %7, %9 : vector<4x128xf32>
    %cst = arith.constant 0.000000e+00 : f32
    %11 = vector.broadcast %cst : f32 to vector<4x128xf32>
    %12 = arith.cmpf oge, %10, %11 : vector<4x128xf32>
    %cst_9 = arith.constant 0.00999999977 : f32
    %13 = vector.broadcast %cst_9 : f32 to vector<4x128xf32>
    %14 = arith.mulf %13, %10 : vector<4x128xf32>
    %15 = arith.select %12, %10, %14 : vector<4x128xi1>, vector<4x128xf32>
    %c0_10 = arith.constant 0 : index
    %c0_11 = arith.constant 0 : index
    %c0_12 = arith.constant 0 : index
    %16 = vector.load %arg5[%c0_10, %c0_11, %c0_12] : memref<1x4x128xf32, #tpu.memory_space<vmem>>, vector<1x4x128xf32>
    %17 = vector.shape_cast %16 : vector<1x4x128xf32> to vector<4x128xf32>
    %18 = vector.shape_cast %15 : vector<4x128xf32> to vector<1x4x128xf32>
    tpu.vector_store %arg5[%c0_10, %c0_11, %c0_12], %18 {strides = array<i32>} : memref<1x4x128xf32, #tpu.memory_space<vmem>>, vector<1x4x128xf32>,
    return
  }
  func.func @transform_0(%arg0: i32) -> (i32, i32, i32) {
    %c0_i32 = arith.constant 0 : i32
    %c0_i32_0 = arith.constant 0 : i32
    %c0_i32_1 = arith.constant 0 : i32
    return %arg0, %c0_i32, %c0_i32_0 : i32, i32, i32
  }
  func.func @transform_1(%arg0: i32) -> (i32, i32, i32) {
    %c0_i32 = arith.constant 0 : i32
    %c0_i32_0 = arith.constant 0 : i32
    %c0_i32_1 = arith.constant 0 : i32
    return %arg0, %c0_i32, %c0_i32_0 : i32, i32, i32
  }
  func.func @transform_2(%arg0: i32) -> (i32, i32) {
    %c0_i32 = arith.constant 0 : i32
    %c0_i32_0 = arith.constant 0 : i32
    %c0_i32_1 = arith.constant 0 : i32
    return %c0_i32, %c0_i32_0 : i32, i32
  }
  func.func @transform_3(%arg0: i32) -> (i32, i32) {
    %c0_i32 = arith.constant 0 : i32
    %c0_i32_0 = arith.constant 0 : i32
    %c0_i32_1 = arith.constant 0 : i32
    return %c0_i32, %c0_i32_0 : i32, i32
  }
  func.func @transform_4(%arg0: i32) -> (i32, i32, i32) {
    %c0_i32 = arith.constant 0 : i32
    %c0_i32_0 = arith.constant 0 : i32
    %c0_i32_1 = arith.constant 0 : i32
    return %arg0, %c0_i32, %c0_i32_0 : i32, i32, i32
  }
}

</mosaic_0001>

<llo_original>
// kernel: basic_block.3
$region0: #{basic_block.3}
  #allocation0 [shape = 'u32[]', space=smem, size = 0x4, offset = 0x4, fixed_abs, tag = 'smem constant byte address 0x4 - core index']
  #allocation1 [shape = 'u32[144,128]{1,0:T(1,128)}', space=vmem, size = 0x12000, scoped, tag = 'internal scratch']
  %s0 = inlined_call_operand.vmem [shape: f32[2,16,32], index: 0, kind: input, shape index: {}]
  %s1 = inlined_call_operand.vmem [shape: bf16[96,32], index: 1, kind: input, shape index: {}]
  %s2 = inlined_call_operand.vmem [shape: f32[2,16,32], index: 2, kind: output, shape index: {0}]
  %s3 = inlined_call_operand.vmem [shape: f32[2,2,32], index: 3, kind: output, shape index: {1}]
  %4 = xla_tuple %s2, %s3
  %s5 = sld [smem:[#allocation0]]
  $region49: #{basic_block.3} parent=0
    _
  %s7 = ssub.s32 1, %s5
  %s8 = scalar_select 0, %s7, %s5
  loop: start=0, step=1, limit=4
  $region2: #{basic_block.3} parent=0 // loop_pre_header
    _
  $region3: #{basic_block.3} parent=0 // loop_header
    %s10 = sphi 0, %s14
    %p11 = scmp.ge.s32.totalorder %s10, 4
    %s20 = sphi 0, %s22
    %s23 = sphi 0, %s20
    %s24 = sphi 0, %s23
    %s40 = sphi 0, %s24
    %s44 = sphi 0, %s44
    %s46 = sphi 0, %s44
    %s47 = sphi 0, %s46
    %s61 = sphi 0, %s47
    %s67 = sphi 0, %s69
    %s70 = sphi 0, %s67
    %s71 = sphi 0, %s70
    %s87 = sphi 0, %s71
    %s93 = sphi 0, %s95
    %s96 = sphi 0, %s93
    %s97 = sphi 0, %s96
    %s113 = sphi 0, %s97
  $region4: #{basic_block.3} parent=0 // loop_header_branch
    %13 = sbr.rel (%p11) target = $region8
  $region5: #{basic_block.3} parent=0 // loop_body
    %s15 = ssub.s32 %s10, 1
    %s16 = ssub.s32 %s10, 2
    %s17 = sadd.s32 %s10, 1
    %s18 = ssub.s32 %s10, %s17
    %p19 = scmp.eq.s32.totalorder %s18, 0
    %s21 = sadd.s32 %s20, 1
    %s22 = scalar_select %p19, %s20, %s21
    %p25 = pneg %p19
    %p26 = scmp.eq.s32.totalorder %s10, 1
    %p27 = por %p25, %p26
    %p28 = scmp.ne.s32.totalorder %s20, %s23
    %p29 = scmp.eq.s32.totalorder %s10, 0
    %p30 = por %p28, %p29
    %p31 = scmp.ne.s32.totalorder %s20, %s23
    %p32 = scmp.eq.s32.totalorder %s15, 1
    %p33 = por %p31, %p32
    %p34 = scmp.ne.s32.totalorder %s23, %s24
    %p35 = scmp.eq.s32.totalorder %s15, 0
    %p36 = por %p34, %p35
    %p37 = scmp.ne.s32.totalorder %s23, %s24
    %p38 = scmp.eq.s32.totalorder %s16, 1
    %p39 = por %p37, %p38
    %p41 = scmp.ne.s32.totalorder %s24, %s40
    %p42 = scmp.eq.s32.totalorder %s16, 0
    %p43 = por %p41, %p42
    %s45 = sadd.s32 %s44, 1
    %p48 = scmp.eq.s32.totalorder %s10, 1
    %p49 = scmp.ne.s32.totalorder %s44, %s46
    %p50 = scmp.eq.s32.totalorder %s10, 0
    %p51 = por %p49, %p50
    %p52 = scmp.ne.s32.totalorder %s44, %s46
    %p53 = scmp.eq.s32.totalorder %s15, 1
    %p54 = por %p52, %p53
    %p55 = scmp.ne.s32.totalorder %s46, %s47
    %p56 = scmp.eq.s32.totalorder %s15, 0
    %p57 = por %p55, %p56
    %p58 = scmp.ne.s32.totalorder %s46, %s47
    %p59 = scmp.eq.s32.totalorder %s16, 1
    %p60 = por %p58, %p59
    %p62 = scmp.ne.s32.totalorder %s47, %s61
    %p63 = scmp.eq.s32.totalorder %s16, 0
    %p64 = por %p62, %p63
    %s65 = ssub.s32 %s10, %s17
    %p66 = scmp.eq.s32.totalorder %s65, 0
    %s68 = sadd.s32 %s67, 1
    %s69 = scalar_select %p66, %s67, %s68
    %p72 = pneg %p66
    %p73 = scmp.eq.s32.totalorder %s10, 1
    %p74 = por %p72, %p73
    %p75 = scmp.ne.s32.totalorder %s67, %s70
    %p76 = scmp.eq.s32.totalorder %s10, 0
    %p77 = por %p75, %p76
    %p78 = scmp.ne.s32.totalorder %s67, %s70
    %p79 = scmp.eq.s32.totalorder %s15, 1
    %p80 = por %p78, %p79
    %p81 = scmp.ne.s32.totalorder %s70, %s71
    %p82 = scmp.eq.s32.totalorder %s15, 0
    %p83 = por %p81, %p82
    %p84 = scmp.ne.s32.totalorder %s70, %s71
    %p85 = scmp.eq.s32.totalorder %s16, 1
    %p86 = por %p84, %p85
    %p88 = scmp.ne.s32.totalorder %s71, %s87
    %p89 = scmp.eq.s32.totalorder %s16, 0
    %p90 = por %p88, %p89
    %s91 = ssub.s32 %s10, %s17
    %p92 = scmp.eq.s32.totalorder %s91, 0
    %s94 = sadd.s32 %s93, 1
    %s95 = scalar_select %p92, %s93, %s94
    %p98 = pneg %p92
    %p99 = scmp.eq.s32.totalorder %s10, 1
    %p100 = por %p98, %p99
    %p101 = scmp.ne.s32.totalorder %s93, %s96
    %p102 = scmp.eq.s32.totalorder %s10, 0
    %p103 = por %p101, %p102
    %p104 = scmp.ne.s32.totalorder %s93, %s96
    %p105 = scmp.eq.s32.totalorder %s15, 1
    %p106 = por %p104, %p105
    %p107 = scmp.ne.s32.totalorder %s96, %s97
    %p108 = scmp.eq.s32.totalorder %s15, 0
    %p109 = por %p107, %p108
    %p110 = scmp.ne.s32.totalorder %s96, %s97
    %p111 = scmp.eq.s32.totalorder %s16, 1
    %p112 = por %p110, %p111
    %p114 = scmp.ne.s32.totalorder %s97, %s113
    %p115 = scmp.eq.s32.totalorder %s16, 0
    %p116 = por %p114, %p115
    %p117 = scmp.le.s32.totalorder 1, %s10
    %p118 = scmp.lt.s32.totalorder %s10, 3
    %p119 = pnand %p117, %p118
    %p120 = pneg %p119
    // Predicated region
    $region9: #{basic_block.3} parent=5 // pred_check
      _
    $region10: #{basic_block.3} parent=5 // pred_check_branch
      %122 = sbr.rel (%p119) target = $region12
    $region11: #{basic_block.3} parent=5 // pred_region
      %s123 = ssub.s32 %s10, 1
      // Predicated region
      $region13: #{basic_block.3} parent=11 // pred_check
        %p124 = pneg %p57
      $region14: #{basic_block.3} parent=11 // pred_check_branch
        %126 = sbr.rel (%p124) target = $region16
      $region15: #{basic_block.3} parent=11 // pred_region
        _
      $region16: #{basic_block.3} parent=11 // pred_fallthru
        _
    $region12: #{basic_block.3} parent=5 // pred_fallthru
      _
    %p127 = scmp.lt.s32.totalorder %s10, 2
    // Predicated region
    $region17: #{basic_block.3} parent=5 // pred_check
      %p128 = pneg %p127
    $region18: #{basic_block.3} parent=5 // pred_check_branch
      %130 = sbr.rel (%p128) target = $region20
    $region19: #{basic_block.3} parent=5 // pred_region
      // Predicated region
      $region21: #{basic_block.3} parent=19 // pred_check
        %p131 = pneg %p30
      $region22: #{basic_block.3} parent=19 // pred_check_branch
        %133 = sbr.rel (%p131) target = $region24
      $region23: #{basic_block.3} parent=19 // pred_region
        %p134 = scmp.lt.s32.totalorder %s10, 1
        %s135 = scalar_select %p134, %s10, 1
        %s136 = smul.addr %s135, 2
        %s137 = smul.addr %s136, 8
        %s138 = scalar_lea.vmem %s0, %s137
      $region24: #{basic_block.3} parent=19 // pred_fallthru
        _
    $region20: #{basic_block.3} parent=5 // pred_fallthru
      _
    %p139 = scmp.le.s32.totalorder 1, %s10
    %p140 = scmp.lt.s32.totalorder %s10, 3
    %p141 = pnand %p139, %p140
    %p142 = pneg %p141
    // Predicated region
    $region25: #{basic_block.3} parent=5 // pred_check
      _
    $region26: #{basic_block.3} parent=5 // pred_check_branch
      %144 = sbr.rel (%p141) target = $region28
    $region27: #{basic_block.3} parent=5 // pred_region
      %s145 = ssub.s32 %s10, 1
      %p146 = scmp.lt.s32.totalorder %s15, 1
      %s147 = scalar_select %p146, %s15, 1
      %s148 = smul.addr %s147, 2
      %s149 = smul.addr %s148, 8
      %s150 = scalar_lea.vmem %s0, %s149
      %p151 = pneg %p36
      %p152 = pneg %p33
      %p153 = pneg %p57
      %p154 = pneg %p54
      %p155 = pneg %p83
      %p156 = pneg %p80
      %p157 = scmp.lt.s32.totalorder %s15, 1
      %s158 = scalar_select %p157, %s15, 1
      %s159 = smul.addr %s158, 2
      %s160 = smul.addr %s159, 8
      %s161 = scalar_lea.vmem %s2, %s160
      %p162 = pneg %p109
      %p163 = pneg %p106
      %p164 = scmp.lt.s32.totalorder %s15, 1
      %s165 = scalar_select %p164, %s15, 1
      %s166 = smul.addr %s165, 2
      %s167 = scalar_lea.vmem %s3, %s166
      %p168 = scmp.lt.s32.totalorder %s15, 1
      %s169 = scalar_select %p168, %s15, 1
      %s170 = smul.addr %s169, 2
      %s171 = smul.addr %s170, 8
      %s172 = scalar_lea.vmem %s0, %s171
      %p173 = scmp.lt.s32.totalorder %s15, 1
      %s174 = scalar_select %p173, %s15, 1
      %s175 = smul.addr %s174, 2
      %s176 = smul.addr %s175, 8
      %s177 = scalar_lea.vmem %s2, %s176
      %p178 = scmp.lt.s32.totalorder %s15, 1
      %s179 = scalar_select %p178, %s15, 1
      %s180 = smul.addr %s179, 2
      %s181 = scalar_lea.vmem %s3, %s180
      %v183 = vld [vmem:[%s172] sm:$0xff]
      %v184 = vld [vmem:[%s172 + $0x8] sm:$0xff]
      %vm187 = vcmask 1040384
      %v188 = vrot.slane %v183, 7
      %v189 = vrot.slane %v184, 7
      %v190 = vsel %vm187, %v188, %v189
      %v194 = vsel %vm187, 0.0, %v188
      %v195 = vsel %vm187, %v189, 0.0
      %vm198 = vcmask 1046528
      %v199 = vrot.slane %v194, 1
      %v200 = vrot.slane %v190, 1
      %v201 = vsel %vm198, %v199, %v200
      %v202 = vrot.slane %v195, 1
      %v203 = vsel %vm198, %v200, %v202
      %204 = vrot.lane.b32.xlu0 %v201, 32
      %v205 = vpop.permute.xlu0 %204
      %206 = vrot.lane.b32.xlu0 %v203, 32
      %v207 = vpop.permute.xlu0 %206
      %vm210 = vcmask 1045504
      %v211 = vrot.slane %v194, 2
      %v212 = vrot.slane %v190, 2
      %v213 = vsel %vm210, %v211, %v212
      %v214 = vrot.slane %v195, 2
      %v215 = vsel %vm210, %v212, %v214
      %216 = vrot.lane.b32.xlu0 %v213, 64
      %v217 = vpop.permute.xlu0 %216
      %218 = vrot.lane.b32.xlu0 %v215, 64
      %v219 = vpop.permute.xlu0 %218
      %vm222 = vcmask 261120
      %v223 = vsel %vm222, %v194, %v205
      %v224 = vsel %vm222, %v190, %v207
      %vm225 = vcmask 523264
      %v226 = vsel %vm225, %v223, %v217
      %v227 = vsel %vm225, %v224, %v219
      %v228 = vpack.c.bf16 %v227, %v226
      %v229 = vld [vmem:[%s1] sm:$0xf]
      %v230 = vld [vmem:[%s1 + $0x4] sm:$0xf]
      %v231 = vld [vmem:[%s1 + $0x8] sm:$0xf]
      %v232 = vld [vmem:[%s1 + $0xc] sm:$0xf]
      %v233 = vld [vmem:[%s1 + $0x10] sm:$0xf]
      %v234 = vld [vmem:[%s1 + $0x14] sm:$0xf]
      %v235 = vld [vmem:[%s1 + $0x18] sm:$0xf]
      %v236 = vld [vmem:[%s1 + $0x1c] sm:$0xf]
      %v237 = vld [vmem:[%s1 + $0x20] sm:$0xf]
      %v238 = vld [vmem:[%s1 + $0x24] sm:$0xf]
      %v239 = vld [vmem:[%s1 + $0x28] sm:$0xf]
      %v240 = vld [vmem:[%s1 + $0x2c] sm:$0xf]
      %v253 = vunpack.c.l.b16 %v229
      %v254 = vunpack.c.l.b16 %v230
      %v255 = vunpack.c.l.b16 %v231
      %v256 = vunpack.c.l.b16 %v232
      %v257 = vunpack.c.l.b16 %v233
      %v258 = vunpack.c.l.b16 %v234
      %v259 = vunpack.c.l.b16 %v235
      %v260 = vunpack.c.l.b16 %v236
      %v261 = vunpack.c.l.b16 %v237
      %v262 = vunpack.c.l.b16 %v238
      %v263 = vunpack.c.l.b16 %v239
      %v264 = vunpack.c.l.b16 %v240
      %v265 = vpack.c.b16 %v254, %v253
      %v266 = vpack.c.b16 %v256, %v255
      %v267 = vpack.c.b16 %v258, %v257
      %v268 = vpack.c.b16 %v260, %v259
      %v269 = vpack.c.b16 %v262, %v261
      %v270 = vpack.c.b16 %v264, %v263
      %vm277 = vcmask 785408
      %v279 = vsel %vm277, %v228, 0
      %281 = vmatprep.subr.bf16.mxu0 0
      %282 = vmatpush1.bf16.msra.mxu0 %v265
      %283 = vmatprep.subr.bf16.mxu0 0
      %284 = vmatpush1.bf16.msra.mxu0 %v266
      %285 = vmatprep.subr.bf16.mxu0 0
      %286 = vmatpush1.bf16.msra.mxu0 %v267
      %287 = vmatprep.subr.bf16.mxu0 0
      %288 = vmatpush1.bf16.msra.mxu0 %v268
      %289 = vmatprep.subr.bf16.mxu0 0
      %290 = vmatpush1.bf16.msra.mxu0 %v269
      %291 = vmatprep.subr.bf16.mxu0 0
      %292 = vmatpush1.bf16.msra.mxu0 %v270
      %293 = vmatprep.subr.bf16.mxu0 0
      %294 = vmatpush1.bf16.msra.mxu0 0
      %295 = vmatprep.subr.bf16.mxu0 0
      %296 = vmatpush1.bf16.msra.mxu0 0
      %297 = vmatprep.subr.bf16.mxu0 0
      %298 = vmatpush1.bf16.msra.mxu0 0
      %299 = vmatprep.subr.bf16.mxu0 0
      %300 = vmatpush1.bf16.msra.mxu0 0
      %301 = vmatprep.subr.bf16.mxu0 0
      %302 = vmatpush1.bf16.msra.mxu0 0
      %303 = vmatprep.subr.bf16.mxu0 0
      %304 = vmatpush1.bf16.msra.mxu0 0
      %305 = vmatprep.subr.bf16.mxu0 0
      %306 = vmatpush1.bf16.msra.mxu0 0
      %307 = vmatprep.subr.bf16.mxu0 0
      %308 = vmatpush1.bf16.msra.mxu0 0
      %309 = vmatprep.subr.bf16.mxu0 0
      %310 = vmatpush1.bf16.msra.mxu0 0
      %311 = vmatprep.subr.bf16.mxu0 0
      %312 = vmatpush1.bf16.msra.mxu0 0
      %313 = vmatprep.mubr.bf16.mxu0 0
      %314 = vmatmul.mubr.bf16.gmra.mrb[0].mxu0 %v279
      %v315 = vpop.f32.mrb[0].mxu0
      %v316 = vadd.f32 0.0, %v315
      %v317 = vpop.f32.mrb[0].mxu0
      %v318 = vpop.f32.mrb[0].mxu0
      %v319 = vadd.f32 0.0, %v318
      %v320 = vpop.f32.mrb[0].mxu0
      %321 = vdwg.mxu0
      %322 = vst.msk [vmem:[%s177] sm:$0xff] %vm222, %v316
      %323 = vst.msk [vmem:[%s177 + $0x8] sm:$0xff] %vm222, %v319
      %v324 = vsel %vm222, %v316, 0.0
      %v325 = vsel %vm222, %v319, 0.0
      %v326 = vadd.f32 %v324, %v325
      %v327 = vrot.slane %v326, 4
      %v328 = vadd.f32 %v326, %v327
      %v329 = vrot.slane %v328, 2
      %v330 = vadd.f32 %v328, %v329
      %v331 = vrot.slane %v330, 1
      %v332 = vadd.f32 %v330, %v331
      %v333 = vmul.f32 %v316, %v316
      %v334 = vmul.f32 %v319, %v319
      %v335 = vsel %vm222, %v333, 0.0
      %v336 = vsel %vm222, %v334, 0.0
      %v337 = vadd.f32 %v335, %v336
      %v338 = vrot.slane %v337, 4
      %v339 = vadd.f32 %v337, %v338
      %v340 = vrot.slane %v339, 2
      %v341 = vadd.f32 %v339, %v340
      %v342 = vrot.slane %v341, 1
      %v343 = vadd.f32 %v341, %v342
      %v344 = vsel %vm187, %v332, %v343
      %vm345 = vcmask 254976
      %346 = vst.msk [vmem:[%s181] sm:$0x3] %vm345, %v344
      %p347 = scmp.lt.s32.totalorder %s15, 1
      %s348 = scalar_select %p347, %s15, 1
      %s349 = smul.addr %s348, 2
      %s350 = smul.addr %s349, 8
      %s351 = scalar_lea.vmem %s2, %s350
      %p352 = scmp.lt.s32.totalorder %s15, 1
      %s353 = scalar_select %p352, %s15, 1
      %s354 = smul.addr %s353, 2
      %s355 = scalar_lea.vmem %s3, %s354
      // Predicated region
      $region29: #{basic_block.3} parent=27 // pred_check
        %p356 = pneg %p80
      $region30: #{basic_block.3} parent=27 // pred_check_branch
        %358 = sbr.rel (%p356) target = $region32
      $region31: #{basic_block.3} parent=27 // pred_region
        _
      $region32: #{basic_block.3} parent=27 // pred_fallthru
        _
      // Predicated region
      $region33: #{basic_block.3} parent=27 // pred_check
        %p359 = pneg %p106
      $region34: #{basic_block.3} parent=27 // pred_check_branch
        %361 = sbr.rel (%p359) target = $region36
      $region35: #{basic_block.3} parent=27 // pred_region
        _
      $region36: #{basic_block.3} parent=27 // pred_fallthru
        _
    $region28: #{basic_block.3} parent=5 // pred_fallthru
      _
    %p362 = scmp.le.s32.totalorder 2, %s10
    // Predicated region
    $region37: #{basic_block.3} parent=5 // pred_check
      %p363 = pneg %p362
    $region38: #{basic_block.3} parent=5 // pred_check_branch
      %365 = sbr.rel (%p363) target = $region40
    $region39: #{basic_block.3} parent=5 // pred_region
      %s366 = ssub.s32 %s10, 2
      // Predicated region
      $region41: #{basic_block.3} parent=39 // pred_check
        %p367 = pneg %p86
      $region42: #{basic_block.3} parent=39 // pred_check_branch
        %369 = sbr.rel (%p367) target = $region44
      $region43: #{basic_block.3} parent=39 // pred_region
        %p370 = scmp.lt.s32.totalorder %s16, 1
        %s371 = scalar_select %p370, %s16, 1
        %s372 = smul.addr %s371, 2
        %s373 = smul.addr %s372, 8
        %s374 = scalar_lea.vmem %s2, %s373
      $region44: #{basic_block.3} parent=39 // pred_fallthru
        _
      // Predicated region
      $region45: #{basic_block.3} parent=39 // pred_check
        %p375 = pneg %p112
      $region46: #{basic_block.3} parent=39 // pred_check_branch
        %377 = sbr.rel (%p375) target = $region48
      $region47: #{basic_block.3} parent=39 // pred_region
        %p378 = scmp.lt.s32.totalorder %s16, 1
        %s379 = scalar_select %p378, %s16, 1
        %s380 = smul.addr %s379, 2
        %s381 = scalar_lea.vmem %s3, %s380
      $region48: #{basic_block.3} parent=39 // pred_fallthru
        _
    $region40: #{basic_block.3} parent=5 // pred_fallthru
      _
  $region6: #{basic_block.3} parent=0 // loop_footer
    %s14 = sadd.s32 1, %s10
  $region7: #{basic_block.3} parent=0 // loop_footer_branch
    %9 = sbr.rel target = $region3
  $region8: #{basic_block.3} parent=0 // loop_exit
    _

// kernel: basic_block.4
$region0: #{basic_block.4}
  #allocation0 [shape = 'u32[]', space=smem, size = 0x4, offset = 0x4, fixed_abs, tag = 'smem constant byte address 0x4 - core index']
  #allocation1 [shape = 'u32[144,128]{1,0:T(1,128)}', space=vmem, size = 0x12000, scoped, tag = 'internal scratch']
  %s0 = inlined_call_operand.vmem [shape: f32[2,16,32], index: 0, kind: input, shape index: {}]
  %s1 = inlined_call_operand.vmem [shape: f32[1,32], index: 1, kind: input, shape index: {}]
  %s2 = inlined_call_operand.vmem [shape: f32[1,32], index: 2, kind: input, shape index: {}]
  %s3 = inlined_call_operand.vmem [shape: bf16[96,32], index: 3, kind: input, shape index: {}]
  %s4 = inlined_call_operand.vmem [shape: f32[2,16,32], index: 4, kind: output, shape index: {0}]
  %s5 = inlined_call_operand.vmem [shape: f32[2,2,32], index: 5, kind: output, shape index: {1}]
  %6 = xla_tuple %s4, %s5
  %s7 = sld [smem:[#allocation0]]
  $region57: #{basic_block.4} parent=0
    _
  %s9 = ssub.s32 1, %s7
  %s10 = scalar_select 0, %s9, %s7
  loop: start=0, step=1, limit=4
  $region2: #{basic_block.4} parent=0 // loop_pre_header
    _
  $region3: #{basic_block.4} parent=0 // loop_header
    %s12 = sphi 0, %s16
    %p13 = scmp.ge.s32.totalorder %s12, 4
    %s22 = sphi 0, %s24
    %s25 = sphi 0, %s22
    %s26 = sphi 0, %s25
    %s42 = sphi 0, %s26
    %s46 = sphi 0, %s46
    %s48 = sphi 0, %s46
    %s49 = sphi 0, %s48
    %s63 = sphi 0, %s49
    %s67 = sphi 0, %s67
    %s69 = sphi 0, %s67
    %s70 = sphi 0, %s69
    %s84 = sphi 0, %s70
    %s88 = sphi 0, %s88
    %s90 = sphi 0, %s88
    %s91 = sphi 0, %s90
    %s105 = sphi 0, %s91
    %s111 = sphi 0, %s113
    %s114 = sphi 0, %s111
    %s115 = sphi 0, %s114
    %s131 = sphi 0, %s115
    %s137 = sphi 0, %s139
    %s140 = sphi 0, %s137
    %s141 = sphi 0, %s140
    %s157 = sphi 0, %s141
  $region4: #{basic_block.4} parent=0 // loop_header_branch
    %15 = sbr.rel (%p13) target = $region8
  $region5: #{basic_block.4} parent=0 // loop_body
    %s17 = ssub.s32 %s12, 1
    %s18 = ssub.s32 %s12, 2
    %s19 = sadd.s32 %s12, 1
    %s20 = ssub.s32 %s12, %s19
    %p21 = scmp.eq.s32.totalorder %s20, 0
    %s23 = sadd.s32 %s22, 1
    %s24 = scalar_select %p21, %s22, %s23
    %p27 = pneg %p21
    %p28 = scmp.eq.s32.totalorder %s12, 1
    %p29 = por %p27, %p28
    %p30 = scmp.ne.s32.totalorder %s22, %s25
    %p31 = scmp.eq.s32.totalorder %s12, 0
    %p32 = por %p30, %p31
    %p33 = scmp.ne.s32.totalorder %s22, %s25
    %p34 = scmp.eq.s32.totalorder %s17, 1
    %p35 = por %p33, %p34
    %p36 = scmp.ne.s32.totalorder %s25, %s26
    %p37 = scmp.eq.s32.totalorder %s17, 0
    %p38 = por %p36, %p37
    %p39 = scmp.ne.s32.totalorder %s25, %s26
    %p40 = scmp.eq.s32.totalorder %s18, 1
    %p41 = por %p39, %p40
    %p43 = scmp.ne.s32.totalorder %s26, %s42
    %p44 = scmp.eq.s32.totalorder %s18, 0
    %p45 = por %p43, %p44
    %s47 = sadd.s32 %s46, 1
    %p50 = scmp.eq.s32.totalorder %s12, 1
    %p51 = scmp.ne.s32.totalorder %s46, %s48
    %p52 = scmp.eq.s32.totalorder %s12, 0
    %p53 = por %p51, %p52
    %p54 = scmp.ne.s32.totalorder %s46, %s48
    %p55 = scmp.eq.s32.totalorder %s17, 1
    %p56 = por %p54, %p55
    %p57 = scmp.ne.s32.totalorder %s48, %s49
    %p58 = scmp.eq.s32.totalorder %s17, 0
    %p59 = por %p57, %p58
    %p60 = scmp.ne.s32.totalorder %s48, %s49
    %p61 = scmp.eq.s32.totalorder %s18, 1
    %p62 = por %p60, %p61
    %p64 = scmp.ne.s32.totalorder %s49, %s63
    %p65 = scmp.eq.s32.totalorder %s18, 0
    %p66 = por %p64, %p65
    %s68 = sadd.s32 %s67, 1
    %p71 = scmp.eq.s32.totalorder %s12, 1
    %p72 = scmp.ne.s32.totalorder %s67, %s69
    %p73 = scmp.eq.s32.totalorder %s12, 0
    %p74 = por %p72, %p73
    %p75 = scmp.ne.s32.totalorder %s67, %s69
    %p76 = scmp.eq.s32.totalorder %s17, 1
    %p77 = por %p75, %p76
    %p78 = scmp.ne.s32.totalorder %s69, %s70
    %p79 = scmp.eq.s32.totalorder %s17, 0
    %p80 = por %p78, %p79
    %p81 = scmp.ne.s32.totalorder %s69, %s70
    %p82 = scmp.eq.s32.totalorder %s18, 1
    %p83 = por %p81, %p82
    %p85 = scmp.ne.s32.totalorder %s70, %s84
    %p86 = scmp.eq.s32.totalorder %s18, 0
    %p87 = por %p85, %p86
    %s89 = sadd.s32 %s88, 1
    %p92 = scmp.eq.s32.totalorder %s12, 1
    %p93 = scmp.ne.s32.totalorder %s88, %s90
    %p94 = scmp.eq.s32.totalorder %s12, 0
    %p95 = por %p93, %p94
    %p96 = scmp.ne.s32.totalorder %s88, %s90
    %p97 = scmp.eq.s32.totalorder %s17, 1
    %p98 = por %p96, %p97
    %p99 = scmp.ne.s32.totalorder %s90, %s91
    %p100 = scmp.eq.s32.totalorder %s17, 0
    %p101 = por %p99, %p100
    %p102 = scmp.ne.s32.totalorder %s90, %s91
    %p103 = scmp.eq.s32.totalorder %s18, 1
    %p104 = por %p102, %p103
    %p106 = scmp.ne.s32.totalorder %s91, %s105
    %p107 = scmp.eq.s32.totalorder %s18, 0
    %p108 = por %p106, %p107
    %s109 = ssub.s32 %s12, %s19
    %p110 = scmp.eq.s32.totalorder %s109, 0
    %s112 = sadd.s32 %s111, 1
    %s113 = scalar_select %p110, %s111, %s112
    %p116 = pneg %p110
    %p117 = scmp.eq.s32.totalorder %s12, 1
    %p118 = por %p116, %p117
    %p119 = scmp.ne.s32.totalorder %s111, %s114
    %p120 = scmp.eq.s32.totalorder %s12, 0
    %p121 = por %p119, %p120
    %p122 = scmp.ne.s32.totalorder %s111, %s114
    %p123 = scmp.eq.s32.totalorder %s17, 1
    %p124 = por %p122, %p123
    %p125 = scmp.ne.s32.totalorder %s114, %s115
    %p126 = scmp.eq.s32.totalorder %s17, 0
    %p127 = por %p125, %p126
    %p128 = scmp.ne.s32.totalorder %s114, %s115
    %p129 = scmp.eq.s32.totalorder %s18, 1
    %p130 = por %p128, %p129
    %p132 = scmp.ne.s32.totalorder %s115, %s131
    %p133 = scmp.eq.s32.totalorder %s18, 0
    %p134 = por %p132, %p133
    %s135 = ssub.s32 %s12, %s19
    %p136 = scmp.eq.s32.totalorder %s135, 0
    %s138 = sadd.s32 %s137, 1
    %s139 = scalar_select %p136, %s137, %s138
    %p142 = pneg %p136
    %p143 = scmp.eq.s32.totalorder %s12, 1
    %p144 = por %p142, %p143
    %p145 = scmp.ne.s32.totalorder %s137, %s140
    %p146 = scmp.eq.s32.totalorder %s12, 0
    %p147 = por %p145, %p146
    %p148 = scmp.ne.s32.totalorder %s137, %s140
    %p149 = scmp.eq.s32.totalorder %s17, 1
    %p150 = por %p148, %p149
    %p151 = scmp.ne.s32.totalorder %s140, %s141
    %p152 = scmp.eq.s32.totalorder %s17, 0
    %p153 = por %p151, %p152
    %p154 = scmp.ne.s32.totalorder %s140, %s141
    %p155 = scmp.eq.s32.totalorder %s18, 1
    %p156 = por %p154, %p155
    %p158 = scmp.ne.s32.totalorder %s141, %s157
    %p159 = scmp.eq.s32.totalorder %s18, 0
    %p160 = por %p158, %p159
    %p161 = scmp.le.s32.totalorder 1, %s12
    %p162 = scmp.lt.s32.totalorder %s12, 3
    %p163 = pnand %p161, %p162
    %p164 = pneg %p163
    // Predicated region
    $region9: #{basic_block.4} parent=5 // pred_check
      _
    $region10: #{basic_block.4} parent=5 // pred_check_branch
      %166 = sbr.rel (%p163) target = $region12
    $region11: #{basic_block.4} parent=5 // pred_region
      %s167 = ssub.s32 %s12, 1
      // Predicated region
      $region13: #{basic_block.4} parent=11 // pred_check
        %p168 = pneg %p59
      $region14: #{basic_block.4} parent=11 // pred_check_branch
        %170 = sbr.rel (%p168) target = $region16
      $region15: #{basic_block.4} parent=11 // pred_region
        _
      $region16: #{basic_block.4} parent=11 // pred_fallthru
        _
      // Predicated region
      $region17: #{basic_block.4} parent=11 // pred_check
        %p171 = pneg %p80
      $region18: #{basic_block.4} parent=11 // pred_check_branch
        %173 = sbr.rel (%p171) target = $region20
      $region19: #{basic_block.4} parent=11 // pred_region
        _
      $region20: #{basic_block.4} parent=11 // pred_fallthru
        _
      // Predicated region
      $region21: #{basic_block.4} parent=11 // pred_check
        %p174 = pneg %p101
      $region22: #{basic_block.4} parent=11 // pred_check_branch
        %176 = sbr.rel (%p174) target = $region24
      $region23: #{basic_block.4} parent=11 // pred_region
        _
      $region24: #{basic_block.4} parent=11 // pred_fallthru
        _
    $region12: #{basic_block.4} parent=5 // pred_fallthru
      _
    %p177 = scmp.lt.s32.totalorder %s12, 2
    // Predicated region
    $region25: #{basic_block.4} parent=5 // pred_check
      %p178 = pneg %p177
    $region26: #{basic_block.4} parent=5 // pred_check_branch
      %180 = sbr.rel (%p178) target = $region28
    $region27: #{basic_block.4} parent=5 // pred_region
      // Predicated region
      $region29: #{basic_block.4} parent=27 // pred_check
        %p181 = pneg %p32
      $region30: #{basic_block.4} parent=27 // pred_check_branch
        %183 = sbr.rel (%p181) target = $region32
      $region31: #{basic_block.4} parent=27 // pred_region
        %p184 = scmp.lt.s32.totalorder %s12, 1
        %s185 = scalar_select %p184, %s12, 1
        %s186 = smul.addr %s185, 2
        %s187 = smul.addr %s186, 8
        %s188 = scalar_lea.vmem %s0, %s187
      $region32: #{basic_block.4} parent=27 // pred_fallthru
        _
    $region28: #{basic_block.4} parent=5 // pred_fallthru
      _
    %p189 = scmp.le.s32.totalorder 1, %s12
    %p190 = scmp.lt.s32.totalorder %s12, 3
    %p191 = pnand %p189, %p190
    %p192 = pneg %p191
    // Predicated region
    $region33: #{basic_block.4} parent=5 // pred_check
      _
    $region34: #{basic_block.4} parent=5 // pred_check_branch
      %194 = sbr.rel (%p191) target = $region36
    $region35: #{basic_block.4} parent=5 // pred_region
      %s195 = ssub.s32 %s12, 1
      %p196 = scmp.lt.s32.totalorder %s17, 1
      %s197 = scalar_select %p196, %s17, 1
      %s198 = smul.addr %s197, 2
      %s199 = smul.addr %s198, 8
      %s200 = scalar_lea.vmem %s0, %s199
      %p201 = pneg %p38
      %p202 = pneg %p35
      %p203 = pneg %p59
      %p204 = pneg %p56
      %p205 = pneg %p80
      %p206 = pneg %p77
      %p207 = pneg %p101
      %p208 = pneg %p98
      %p209 = pneg %p127
      %p210 = pneg %p124
      %p211 = scmp.lt.s32.totalorder %s17, 1
      %s212 = scalar_select %p211, %s17, 1
      %s213 = smul.addr %s212, 2
      %s214 = smul.addr %s213, 8
      %s215 = scalar_lea.vmem %s4, %s214
      %p216 = pneg %p153
      %p217 = pneg %p150
      %p218 = scmp.lt.s32.totalorder %s17, 1
      %s219 = scalar_select %p218, %s17, 1
      %s220 = smul.addr %s219, 2
      %s221 = scalar_lea.vmem %s5, %s220
      %p222 = scmp.lt.s32.totalorder %s17, 1
      %s223 = scalar_select %p222, %s17, 1
      %s224 = smul.addr %s223, 2
      %s225 = smul.addr %s224, 8
      %s226 = scalar_lea.vmem %s0, %s225
      %p227 = scmp.lt.s32.totalorder %s17, 1
      %s228 = scalar_select %p227, %s17, 1
      %s229 = smul.addr %s228, 2
      %s230 = smul.addr %s229, 8
      %s231 = scalar_lea.vmem %s4, %s230
      %p232 = scmp.lt.s32.totalorder %s17, 1
      %s233 = scalar_select %p232, %s17, 1
      %s234 = smul.addr %s233, 2
      %s235 = scalar_lea.vmem %s5, %s234
      %v237 = vld [vmem:[%s226] sm:$0xff]
      %v238 = vld [vmem:[%s226 + $0x8] sm:$0xff]
      %v239 = vld [vmem:[%s1] sm:$0x1]
      %v241 = vlaneseq
      %v242 = vshrl.u32 %v241, 7
      %v243 = vsub.s32 0, %v242
      %v244 = vrot.slane %v239, %v243
      %v246 = vmul.f32 %v237, %v244
      %v247 = vmul.f32 %v238, %v244
      %v248 = vld [vmem:[%s2] sm:$0x1]
      %v250 = vlaneseq
      %v251 = vshrl.u32 %v250, 7
      %v252 = vsub.s32 0, %v251
      %v253 = vrot.slane %v248, %v252
      %v255 = vadd.f32 %v246, %v253
      %v256 = vadd.f32 %v247, %v253
      %vm257 = vcmp.ge.f32.partialorder %v255, 0.0
      %vm258 = vcmp.ge.f32.partialorder %v256, 0.0
      %v259 = vmul.f32 %v255, 0.01
      %v260 = vmul.f32 %v256, 0.01
      %v261 = vsel %vm257, %v255, %v259
      %v262 = vsel %vm258, %v256, %v260
      %vm265 = vcmask 1040384
      %v266 = vrot.slane %v261, 7
      %v267 = vrot.slane %v262, 7
      %v268 = vsel %vm265, %v266, %v267
      %v272 = vsel %vm265, 0.0, %v266
      %v273 = vsel %vm265, %v267, 0.0
      %vm276 = vcmask 1046528
      %v277 = vrot.slane %v272, 1
      %v278 = vrot.slane %v268, 1
      %v279 = vsel %vm276, %v277, %v278
      %v280 = vrot.slane %v273, 1
      %v281 = vsel %vm276, %v278, %v280
      %282 = vrot.lane.b32.xlu0 %v279, 32
      %v283 = vpop.permute.xlu0 %282
      %284 = vrot.lane.b32.xlu0 %v281, 32
      %v285 = vpop.permute.xlu0 %284
      %vm288 = vcmask 1045504
      %v289 = vrot.slane %v272, 2
      %v290 = vrot.slane %v268, 2
      %v291 = vsel %vm288, %v289, %v290
      %v292 = vrot.slane %v273, 2
      %v293 = vsel %vm288, %v290, %v292
      %294 = vrot.lane.b32.xlu0 %v291, 64
      %v295 = vpop.permute.xlu0 %294
      %296 = vrot.lane.b32.xlu0 %v293, 64
      %v297 = vpop.permute.xlu0 %296
      %vm300 = vcmask 261120
      %v301 = vsel %vm300, %v272, %v283
      %v302 = vsel %vm300, %v268, %v285
      %vm303 = vcmask 523264
      %v304 = vsel %vm303, %v301, %v295
      %v305 = vsel %vm303, %v302, %v297
      %v306 = vpack.c.bf16 %v305, %v304
      %v307 = vld [vmem:[%s3] sm:$0xf]
      %v308 = vld [vmem:[%s3 + $0x4] sm:$0xf]
      %v309 = vld [vmem:[%s3 + $0x8] sm:$0xf]
      %v310 = vld [vmem:[%s3 + $0xc] sm:$0xf]
      %v311 = vld [vmem:[%s3 + $0x10] sm:$0xf]
      %v312 = vld [vmem:[%s3 + $0x14] sm:$0xf]
      %v313 = vld [vmem:[%s3 + $0x18] sm:$0xf]
      %v314 = vld [vmem:[%s3 + $0x1c] sm:$0xf]
      %v315 = vld [vmem:[%s3 + $0x20] sm:$0xf]
      %v316 = vld [vmem:[%s3 + $0x24] sm:$0xf]
      %v317 = vld [vmem:[%s3 + $0x28] sm:$0xf]
      %v318 = vld [vmem:[%s3 + $0x2c] sm:$0xf]
      %v331 = vunpack.c.l.b16 %v307
      %v332 = vunpack.c.l.b16 %v308
      %v333 = vunpack.c.l.b16 %v309
      %v334 = vunpack.c.l.b16 %v310
      %v335 = vunpack.c.l.b16 %v311
      %v336 = vunpack.c.l.b16 %v312
      %v337 = vunpack.c.l.b16 %v313
      %v338 = vunpack.c.l.b16 %v314
      %v339 = vunpack.c.l.b16 %v315
      %v340 = vunpack.c.l.b16 %v316
      %v341 = vunpack.c.l.b16 %v317
      %v342 = vunpack.c.l.b16 %v318
      %v343 = vpack.c.b16 %v332, %v331
      %v344 = vpack.c.b16 %v334, %v333
      %v345 = vpack.c.b16 %v336, %v335
      %v346 = vpack.c.b16 %v338, %v337
      %v347 = vpack.c.b16 %v340, %v339
      %v348 = vpack.c.b16 %v342, %v341
      %vm355 = vcmask 785408
      %v357 = vsel %vm355, %v306, 0
      %359 = vmatprep.subr.bf16.mxu0 0
      %360 = vmatpush1.bf16.msra.mxu0 %v343
      %361 = vmatprep.subr.bf16.mxu0 0
      %362 = vmatpush1.bf16.msra.mxu0 %v344
      %363 = vmatprep.subr.bf16.mxu0 0
      %364 = vmatpush1.bf16.msra.mxu0 %v345
      %365 = vmatprep.subr.bf16.mxu0 0
      %366 = vmatpush1.bf16.msra.mxu0 %v346
      %367 = vmatprep.subr.bf16.mxu0 0
      %368 = vmatpush1.bf16.msra.mxu0 %v347
      %369 = vmatprep.subr.bf16.mxu0 0
      %370 = vmatpush1.bf16.msra.mxu0 %v348
      %371 = vmatprep.subr.bf16.mxu0 0
      %372 = vmatpush1.bf16.msra.mxu0 0
      %373 = vmatprep.subr.bf16.mxu0 0
      %374 = vmatpush1.bf16.msra.mxu0 0
      %375 = vmatprep.subr.bf16.mxu0 0
      %376 = vmatpush1.bf16.msra.mxu0 0
      %377 = vmatprep.subr.bf16.mxu0 0
      %378 = vmatpush1.bf16.msra.mxu0 0
      %379 = vmatprep.subr.bf16.mxu0 0
      %380 = vmatpush1.bf16.msra.mxu0 0
      %381 = vmatprep.subr.bf16.mxu0 0
      %382 = vmatpush1.bf16.msra.mxu0 0
      %383 = vmatprep.subr.bf16.mxu0 0
      %384 = vmatpush1.bf16.msra.mxu0 0
      %385 = vmatprep.subr.bf16.mxu0 0
      %386 = vmatpush1.bf16.msra.mxu0 0
      %387 = vmatprep.subr.bf16.mxu0 0
      %388 = vmatpush1.bf16.msra.mxu0 0
      %389 = vmatprep.subr.bf16.mxu0 0
      %390 = vmatpush1.bf16.msra.mxu0 0
      %391 = vmatprep.mubr.bf16.mxu0 0
      %392 = vmatmul.mubr.bf16.gmra.mrb[0].mxu0 %v357
      %v393 = vpop.f32.mrb[0].mxu0
      %v394 = vadd.f32 0.0, %v393
      %v395 = vpop.f32.mrb[0].mxu0
      %v396 = vpop.f32.mrb[0].mxu0
      %v397 = vadd.f32 0.0, %v396
      %v398 = vpop.f32.mrb[0].mxu0
      %399 = vdwg.mxu0
      %400 = vst.msk [vmem:[%s231] sm:$0xff] %vm300, %v394
      %401 = vst.msk [vmem:[%s231 + $0x8] sm:$0xff] %vm300, %v397
      %v402 = vsel %vm300, %v394, 0.0
      %v403 = vsel %vm300, %v397, 0.0
      %v404 = vadd.f32 %v402, %v403
      %v405 = vrot.slane %v404, 4
      %v406 = vadd.f32 %v404, %v405
      %v407 = vrot.slane %v406, 2
      %v408 = vadd.f32 %v406, %v407
      %v409 = vrot.slane %v408, 1
      %v410 = vadd.f32 %v408, %v409
      %v411 = vmul.f32 %v394, %v394
      %v412 = vmul.f32 %v397, %v397
      %v413 = vsel %vm300, %v411, 0.0
      %v414 = vsel %vm300, %v412, 0.0
      %v415 = vadd.f32 %v413, %v414
      %v416 = vrot.slane %v415, 4
      %v417 = vadd.f32 %v415, %v416
      %v418 = vrot.slane %v417, 2
      %v419 = vadd.f32 %v417, %v418
      %v420 = vrot.slane %v419, 1
      %v421 = vadd.f32 %v419, %v420
      %v422 = vsel %vm265, %v410, %v421
      %vm423 = vcmask 254976
      %424 = vst.msk [vmem:[%s235] sm:$0x3] %vm423, %v422
      %p425 = scmp.lt.s32.totalorder %s17, 1
      %s426 = scalar_select %p425, %s17, 1
      %s427 = smul.addr %s426, 2
      %s428 = smul.addr %s427, 8
      %s429 = scalar_lea.vmem %s4, %s428
      %p430 = scmp.lt.s32.totalorder %s17, 1
      %s431 = scalar_select %p430, %s17, 1
      %s432 = smul.addr %s431, 2
      %s433 = scalar_lea.vmem %s5, %s432
      // Predicated region
      $region37: #{basic_block.4} parent=35 // pred_check
        %p434 = pneg %p124
      $region38: #{basic_block.4} parent=35 // pred_check_branch
        %436 = sbr.rel (%p434) target = $region40
      $region39: #{basic_block.4} parent=35 // pred_region
        _
      $region40: #{basic_block.4} parent=35 // pred_fallthru
        _
      // Predicated region
      $region41: #{basic_block.4} parent=35 // pred_check
        %p437 = pneg %p150
      $region42: #{basic_block.4} parent=35 // pred_check_branch
        %439 = sbr.rel (%p437) target = $region44
      $region43: #{basic_block.4} parent=35 // pred_region
        _
      $region44: #{basic_block.4} parent=35 // pred_fallthru
        _
    $region36: #{basic_block.4} parent=5 // pred_fallthru
      _
    %p440 = scmp.le.s32.totalorder 2, %s12
    // Predicated region
    $region45: #{basic_block.4} parent=5 // pred_check
      %p441 = pneg %p440
    $region46: #{basic_block.4} parent=5 // pred_check_branch
      %443 = sbr.rel (%p441) target = $region48
    $region47: #{basic_block.4} parent=5 // pred_region
      %s444 = ssub.s32 %s12, 2
      // Predicated region
      $region49: #{basic_block.4} parent=47 // pred_check
        %p445 = pneg %p130
      $region50: #{basic_block.4} parent=47 // pred_check_branch
        %447 = sbr.rel (%p445) target = $region52
      $region51: #{basic_block.4} parent=47 // pred_region
        %p448 = scmp.lt.s32.totalorder %s18, 1
        %s449 = scalar_select %p448, %s18, 1
        %s450 = smul.addr %s449, 2
        %s451 = smul.addr %s450, 8
        %s452 = scalar_lea.vmem %s4, %s451
      $region52: #{basic_block.4} parent=47 // pred_fallthru
        _
      // Predicated region
      $region53: #{basic_block.4} parent=47 // pred_check
        %p453 = pneg %p156
      $region54: #{basic_block.4} parent=47 // pred_check_branch
        %455 = sbr.rel (%p453) target = $region56
      $region55: #{basic_block.4} parent=47 // pred_region
        %p456 = scmp.lt.s32.totalorder %s18, 1
        %s457 = scalar_select %p456, %s18, 1
        %s458 = smul.addr %s457, 2
        %s459 = scalar_lea.vmem %s5, %s458
      $region56: #{basic_block.4} parent=47 // pred_fallthru
        _
    $region48: #{basic_block.4} parent=5 // pred_fallthru
      _
  $region6: #{basic_block.4} parent=0 // loop_footer
    %s16 = sadd.s32 1, %s12
  $region7: #{basic_block.4} parent=0 // loop_footer_branch
    %11 = sbr.rel target = $region3
  $region8: #{basic_block.4} parent=0 // loop_exit
    _

// kernel: basic_block.5
$region0: #{basic_block.5}
  #allocation0 [shape = 'u32[]', space=smem, size = 0x4, offset = 0x4, fixed_abs, tag = 'smem constant byte address 0x4 - core index']
  #allocation1 [shape = 'u32[144,128]{1,0:T(1,128)}', space=vmem, size = 0x12000, scoped, tag = 'internal scratch']
  %s0 = inlined_call_operand.vmem [shape: f32[2,4,128], index: 0, kind: input, shape index: {}]
  %s1 = inlined_call_operand.vmem [shape: f32[2,4,128], index: 1, kind: input, shape index: {}]
  %s2 = inlined_call_operand.vmem [shape: f32[1,128], index: 2, kind: input, shape index: {}]
  %s3 = inlined_call_operand.vmem [shape: f32[1,128], index: 3, kind: input, shape index: {}]
  %s4 = inlined_call_operand.vmem [shape: f32[2,4,128], index: 4, kind: output, shape index: {}]
  %s5 = sld [smem:[#allocation0]]
  $region49: #{basic_block.5} parent=0
    _
  %s7 = ssub.s32 1, %s5
  %s8 = scalar_select 0, %s7, %s5
  loop: start=0, step=1, limit=4
  $region2: #{basic_block.5} parent=0 // loop_pre_header
    _
  $region3: #{basic_block.5} parent=0 // loop_header
    %s10 = sphi 0, %s14
    %p11 = scmp.ge.s32.totalorder %s10, 4
    %s20 = sphi 0, %s22
    %s23 = sphi 0, %s20
    %s24 = sphi 0, %s23
    %s40 = sphi 0, %s24
    %s46 = sphi 0, %s48
    %s49 = sphi 0, %s46
    %s50 = sphi 0, %s49
    %s66 = sphi 0, %s50
    %s70 = sphi 0, %s70
    %s72 = sphi 0, %s70
    %s73 = sphi 0, %s72
    %s87 = sphi 0, %s73
    %s91 = sphi 0, %s91
    %s93 = sphi 0, %s91
    %s94 = sphi 0, %s93
    %s108 = sphi 0, %s94
    %s114 = sphi 0, %s116
    %s117 = sphi 0, %s114
    %s118 = sphi 0, %s117
    %s134 = sphi 0, %s118
  $region4: #{basic_block.5} parent=0 // loop_header_branch
    %13 = sbr.rel (%p11) target = $region8
  $region5: #{basic_block.5} parent=0 // loop_body
    %s15 = ssub.s32 %s10, 1
    %s16 = ssub.s32 %s10, 2
    %s17 = sadd.s32 %s10, 1
    %s18 = ssub.s32 %s10, %s17
    %p19 = scmp.eq.s32.totalorder %s18, 0
    %s21 = sadd.s32 %s20, 1
    %s22 = scalar_select %p19, %s20, %s21
    %p25 = pneg %p19
    %p26 = scmp.eq.s32.totalorder %s10, 1
    %p27 = por %p25, %p26
    %p28 = scmp.ne.s32.totalorder %s20, %s23
    %p29 = scmp.eq.s32.totalorder %s10, 0
    %p30 = por %p28, %p29
    %p31 = scmp.ne.s32.totalorder %s20, %s23
    %p32 = scmp.eq.s32.totalorder %s15, 1
    %p33 = por %p31, %p32
    %p34 = scmp.ne.s32.totalorder %s23, %s24
    %p35 = scmp.eq.s32.totalorder %s15, 0
    %p36 = por %p34, %p35
    %p37 = scmp.ne.s32.totalorder %s23, %s24
    %p38 = scmp.eq.s32.totalorder %s16, 1
    %p39 = por %p37, %p38
    %p41 = scmp.ne.s32.totalorder %s24, %s40
    %p42 = scmp.eq.s32.totalorder %s16, 0
    %p43 = por %p41, %p42
    %s44 = ssub.s32 %s10, %s17
    %p45 = scmp.eq.s32.totalorder %s44, 0
    %s47 = sadd.s32 %s46, 1
    %s48 = scalar_select %p45, %s46, %s47
    %p51 = pneg %p45
    %p52 = scmp.eq.s32.totalorder %s10, 1
    %p53 = por %p51, %p52
    %p54 = scmp.ne.s32.totalorder %s46, %s49
    %p55 = scmp.eq.s32.totalorder %s10, 0
    %p56 = por %p54, %p55
    %p57 = scmp.ne.s32.totalorder %s46, %s49
    %p58 = scmp.eq.s32.totalorder %s15, 1
    %p59 = por %p57, %p58
    %p60 = scmp.ne.s32.totalorder %s49, %s50
    %p61 = scmp.eq.s32.totalorder %s15, 0
    %p62 = por %p60, %p61
    %p63 = scmp.ne.s32.totalorder %s49, %s50
    %p64 = scmp.eq.s32.totalorder %s16, 1
    %p65 = por %p63, %p64
    %p67 = scmp.ne.s32.totalorder %s50, %s66
    %p68 = scmp.eq.s32.totalorder %s16, 0
    %p69 = por %p67, %p68
    %s71 = sadd.s32 %s70, 1
    %p74 = scmp.eq.s32.totalorder %s10, 1
    %p75 = scmp.ne.s32.totalorder %s70, %s72
    %p76 = scmp.eq.s32.totalorder %s10, 0
    %p77 = por %p75, %p76
    %p78 = scmp.ne.s32.totalorder %s70, %s72
    %p79 = scmp.eq.s32.totalorder %s15, 1
    %p80 = por %p78, %p79
    %p81 = scmp.ne.s32.totalorder %s72, %s73
    %p82 = scmp.eq.s32.totalorder %s15, 0
    %p83 = por %p81, %p82
    %p84 = scmp.ne.s32.totalorder %s72, %s73
    %p85 = scmp.eq.s32.totalorder %s16, 1
    %p86 = por %p84, %p85
    %p88 = scmp.ne.s32.totalorder %s73, %s87
    %p89 = scmp.eq.s32.totalorder %s16, 0
    %p90 = por %p88, %p89
    %s92 = sadd.s32 %s91, 1
    %p95 = scmp.eq.s32.totalorder %s10, 1
    %p96 = scmp.ne.s32.totalorder %s91, %s93
    %p97 = scmp.eq.s32.totalorder %s10, 0
    %p98 = por %p96, %p97
    %p99 = scmp.ne.s32.totalorder %s91, %s93
    %p100 = scmp.eq.s32.totalorder %s15, 1
    %p101 = por %p99, %p100
    %p102 = scmp.ne.s32.totalorder %s93, %s94
    %p103 = scmp.eq.s32.totalorder %s15, 0
    %p104 = por %p102, %p103
    %p105 = scmp.ne.s32.totalorder %s93, %s94
    %p106 = scmp.eq.s32.totalorder %s16, 1
    %p107 = por %p105, %p106
    %p109 = scmp.ne.s32.totalorder %s94, %s108
    %p110 = scmp.eq.s32.totalorder %s16, 0
    %p111 = por %p109, %p110
    %s112 = ssub.s32 %s10, %s17
    %p113 = scmp.eq.s32.totalorder %s112, 0
    %s115 = sadd.s32 %s114, 1
    %s116 = scalar_select %p113, %s114, %s115
    %p119 = pneg %p113
    %p120 = scmp.eq.s32.totalorder %s10, 1
    %p121 = por %p119, %p120
    %p122 = scmp.ne.s32.totalorder %s114, %s117
    %p123 = scmp.eq.s32.totalorder %s10, 0
    %p124 = por %p122, %p123
    %p125 = scmp.ne.s32.totalorder %s114, %s117
    %p126 = scmp.eq.s32.totalorder %s15, 1
    %p127 = por %p125, %p126
    %p128 = scmp.ne.s32.totalorder %s117, %s118
    %p129 = scmp.eq.s32.totalorder %s15, 0
    %p130 = por %p128, %p129
    %p131 = scmp.ne.s32.totalorder %s117, %s118
    %p132 = scmp.eq.s32.totalorder %s16, 1
    %p133 = por %p131, %p132
    %p135 = scmp.ne.s32.totalorder %s118, %s134
    %p136 = scmp.eq.s32.totalorder %s16, 0
    %p137 = por %p135, %p136
    %p138 = scmp.le.s32.totalorder 1, %s10
    %p139 = scmp.lt.s32.totalorder %s10, 3
    %p140 = pnand %p138, %p139
    %p141 = pneg %p140
    // Predicated region
    $region9: #{basic_block.5} parent=5 // pred_check
      _
    $region10: #{basic_block.5} parent=5 // pred_check_branch
      %143 = sbr.rel (%p140) target = $region12
    $region11: #{basic_block.5} parent=5 // pred_region
      %s144 = ssub.s32 %s10, 1
      // Predicated region
      $region13: #{basic_block.5} parent=11 // pred_check
        %p145 = pneg %p83
      $region14: #{basic_block.5} parent=11 // pred_check_branch
        %147 = sbr.rel (%p145) target = $region16
      $region15: #{basic_block.5} parent=11 // pred_region
        _
      $region16: #{basic_block.5} parent=11 // pred_fallthru
        _
      // Predicated region
      $region17: #{basic_block.5} parent=11 // pred_check
        %p148 = pneg %p104
      $region18: #{basic_block.5} parent=11 // pred_check_branch
        %150 = sbr.rel (%p148) target = $region20
      $region19: #{basic_block.5} parent=11 // pred_region
        _
      $region20: #{basic_block.5} parent=11 // pred_fallthru
        _
    $region12: #{basic_block.5} parent=5 // pred_fallthru
      _
    %p151 = scmp.lt.s32.totalorder %s10, 2
    // Predicated region
    $region21: #{basic_block.5} parent=5 // pred_check
      %p152 = pneg %p151
    $region22: #{basic_block.5} parent=5 // pred_check_branch
      %154 = sbr.rel (%p152) target = $region24
    $region23: #{basic_block.5} parent=5 // pred_region
      // Predicated region
      $region25: #{basic_block.5} parent=23 // pred_check
        %p155 = pneg %p30
      $region26: #{basic_block.5} parent=23 // pred_check_branch
        %157 = sbr.rel (%p155) target = $region28
      $region27: #{basic_block.5} parent=23 // pred_region
        %p158 = scmp.lt.s32.totalorder %s10, 1
        %s159 = scalar_select %p158, %s10, 1
        %s160 = smul.addr %s159, 4
        %s161 = scalar_lea.vmem %s0, %s160
      $region28: #{basic_block.5} parent=23 // pred_fallthru
        _
      // Predicated region
      $region29: #{basic_block.5} parent=23 // pred_check
        %p162 = pneg %p56
      $region30: #{basic_block.5} parent=23 // pred_check_branch
        %164 = sbr.rel (%p162) target = $region32
      $region31: #{basic_block.5} parent=23 // pred_region
        %p165 = scmp.lt.s32.totalorder %s10, 1
        %s166 = scalar_select %p165, %s10, 1
        %s167 = smul.addr %s166, 4
        %s168 = scalar_lea.vmem %s1, %s167
      $region32: #{basic_block.5} parent=23 // pred_fallthru
        _
    $region24: #{basic_block.5} parent=5 // pred_fallthru
      _
    %p169 = scmp.le.s32.totalorder 1, %s10
    %p170 = scmp.lt.s32.totalorder %s10, 3
    %p171 = pnand %p169, %p170
    %p172 = pneg %p171
    // Predicated region
    $region33: #{basic_block.5} parent=5 // pred_check
      _
    $region34: #{basic_block.5} parent=5 // pred_check_branch
      %174 = sbr.rel (%p171) target = $region36
    $region35: #{basic_block.5} parent=5 // pred_region
      %s175 = ssub.s32 %s10, 1
      %p176 = scmp.lt.s32.totalorder %s15, 1
      %s177 = scalar_select %p176, %s15, 1
      %s178 = smul.addr %s177, 4
      %s179 = scalar_lea.vmem %s0, %s178
      %p180 = pneg %p36
      %p181 = pneg %p33
      %p182 = scmp.lt.s32.totalorder %s15, 1
      %s183 = scalar_select %p182, %s15, 1
      %s184 = smul.addr %s183, 4
      %s185 = scalar_lea.vmem %s1, %s184
      %p186 = pneg %p62
      %p187 = pneg %p59
      %p188 = pneg %p83
      %p189 = pneg %p80
      %p190 = pneg %p104
      %p191 = pneg %p101
      %p192 = pneg %p130
      %p193 = pneg %p127
      %p194 = scmp.lt.s32.totalorder %s15, 1
      %s195 = scalar_select %p194, %s15, 1
      %s196 = smul.addr %s195, 4
      %s197 = scalar_lea.vmem %s4, %s196
      %p198 = scmp.lt.s32.totalorder %s15, 1
      %s199 = scalar_select %p198, %s15, 1
      %s200 = smul.addr %s199, 4
      %s201 = scalar_lea.vmem %s0, %s200
      %p202 = scmp.lt.s32.totalorder %s15, 1
      %s203 = scalar_select %p202, %s15, 1
      %s204 = smul.addr %s203, 4
      %s205 = scalar_lea.vmem %s1, %s204
      %p206 = scmp.lt.s32.totalorder %s15, 1
      %s207 = scalar_select %p206, %s15, 1
      %s208 = smul.addr %s207, 4
      %s209 = scalar_lea.vmem %s4, %s208
      %v210 = vld [vmem:[%s201] sm:$0xf]
      %v211 = vld [vmem:[%s2] sm:$0x1]
      %v213 = vlaneseq
      %v214 = vshrl.u32 %v213, 7
      %v215 = vsub.s32 0, %v214
      %v216 = vrot.slane %v211, %v215
      %v218 = vmul.f32 %v210, %v216
      %v219 = vld [vmem:[%s3] sm:$0x1]
      %v221 = vlaneseq
      %v222 = vshrl.u32 %v221, 7
      %v223 = vsub.s32 0, %v222
      %v224 = vrot.slane %v219, %v223
      %v226 = vadd.f32 %v218, %v224
      %v227 = vld [vmem:[%s205] sm:$0xf]
      %v228 = vadd.f32 %v226, %v227
      %vm229 = vcmp.ge.f32.partialorder %v228, 0.0
      %v230 = vmul.f32 %v228, 0.01
      %v231 = vsel %vm229, %v228, %v230
      %232 = vst [vmem:[%s209] sm:$0xf] %v231
      %p233 = scmp.lt.s32.totalorder %s15, 1
      %s234 = scalar_select %p233, %s15, 1
      %s235 = smul.addr %s234, 4
      %s236 = scalar_lea.vmem %s4, %s235
      // Predicated region
      $region37: #{basic_block.5} parent=35 // pred_check
        %p237 = pneg %p127
      $region38: #{basic_block.5} parent=35 // pred_check_branch
        %239 = sbr.rel (%p237) target = $region40
      $region39: #{basic_block.5} parent=35 // pred_region
        _
      $region40: #{basic_block.5} parent=35 // pred_fallthru
        _
    $region36: #{basic_block.5} parent=5 // pred_fallthru
      _
    %p240 = scmp.le.s32.totalorder 2, %s10
    // Predicated region
    $region41: #{basic_block.5} parent=5 // pred_check
      %p241 = pneg %p240
    $region42: #{basic_block.5} parent=5 // pred_check_branch
      %243 = sbr.rel (%p241) target = $region44
    $region43: #{basic_block.5} parent=5 // pred_region
      %s244 = ssub.s32 %s10, 2
      // Predicated region
      $region45: #{basic_block.5} parent=43 // pred_check
        %p245 = pneg %p133
      $region46: #{basic_block.5} parent=43 // pred_check_branch
        %247 = sbr.rel (%p245) target = $region48
      $region47: #{basic_block.5} parent=43 // pred_region
        %p248 = scmp.lt.s32.totalorder %s16, 1
        %s249 = scalar_select %p248, %s16, 1
        %s250 = smul.addr %s249, 4
        %s251 = scalar_lea.vmem %s4, %s250
      $region48: #{basic_block.5} parent=43 // pred_fallthru
        _
    $region44: #{basic_block.5} parent=5 // pred_fallthru
      _
  $region6: #{basic_block.5} parent=0 // loop_footer
    %s14 = sadd.s32 1, %s10
  $region7: #{basic_block.5} parent=0 // loop_footer_branch
    %9 = sbr.rel target = $region3
  $region8: #{basic_block.5} parent=0 // loop_exit
    _

</llo_original>
